<compile_context>
chip_gen: v7x
topology: tpu7x:2x2x1
jax: 0.10.0
libtpu: 0.0.40
codegen_flags: <defaults>
</compile_context>

<pallas_src>
import functools

import jax
import jax.numpy as jnp
from jax.experimental import pallas as pl
from jax.experimental.pallas import tpu as pltpu


# ----------------------------- Pallas kernel -------------------------------- #

def _layernorm_kernel(alpha_ref, bias_ref, x_ref, o_ref, *, eps: float):
    # alpha_ref, bias_ref: (1, 1) scalars in SMEM
    # x_ref, o_ref:        (TM, D) tiles in VMEM
    x = x_ref[...].astype(jnp.float32)
    d = x.shape[-1]

    mean = jnp.mean(x, axis=-1, keepdims=True)                 # XLU reduce
    centered = x - mean
    # Unbiased variance (divide by D-1) to match torch.Tensor.std().
    var = jnp.sum(centered * centered, axis=-1, keepdims=True) / max(d - 1, 1)
    inv = jax.lax.rsqrt(var + eps)                              # EUP

    alpha = alpha_ref[0, 0]
    bias = bias_ref[0, 0]
    o_ref[...] = (alpha * centered * inv + bias).astype(o_ref.dtype)


def _pick_row_tile(rows: int, d: int, target_bytes: int = 2 << 20) -> int:
    """Largest row tile that (a) divides rows, (b) is a multiple of 8 or the full
    extent, (c) keeps one f32 x-tile around ~2 MiB (VMEM-safe under double
    buffering on v7x's 64 MiB)."""
    max_rows = max(8, min(1024, (target_bytes // (d * 4)) // 8 * 8))
    if rows <= max_rows:
        return rows                      # single/full block: always legal
    for tm in range(max_rows, 7, -8):    # multiples of 8 only
        if rows % tm == 0:
            return tm
    return rows                          # fallback: one full block


def layernorm_pallas(x: jnp.ndarray, alpha, bias, eps: float = 1e-6) -> jnp.ndarray:
    """LayerNormalization over the last dim with scalar alpha/bias, unbiased std."""
    orig_shape = x.shape
    d = orig_shape[-1]
    rows = 1
    for s in orig_shape[:-1]:
        rows *= s
    x2 = x.reshape(rows, d)

    tm = _pick_row_tile(rows, d)
    grid = (rows // tm,)

    alpha_s = jnp.asarray(alpha, jnp.float32).reshape(1, 1)
    bias_s = jnp.asarray(bias, jnp.float32).reshape(1, 1)

    out = pl.pallas_call(
        functools.partial(_layernorm_kernel, eps=float(eps)),
        out_shape=jax.ShapeDtypeStruct((rows, d), x.dtype),
        grid=grid,
        in_specs=[
            pl.BlockSpec(memory_space=pltpu.MemorySpace.SMEM),   # alpha (1,1)
            pl.BlockSpec(memory_space=pltpu.MemorySpace.SMEM),   # bias  (1,1)
            pl.BlockSpec((tm, d), lambda i: (i, 0)),             # x rows tile
        ],
        out_specs=pl.BlockSpec((tm, d), lambda i: (i, 0)),
        compiler_params=pltpu.CompilerParams(
            dimension_semantics=("parallel",),
        ),
    )(alpha_s, bias_s, x2)

    return out.reshape(orig_shape)


# ----------------------------- Encoder forward ------------------------------ #

def encoder_forward(x, mask, layers=(), alpha=1.0, bias=0.0, eps: float = 1e-6):
    """Encoder.forward: apply layer stack, then LayerNormalization (Pallas).

    `layers` is a sequence of JAX callables layer(x, mask) -> x mirroring the
    nn.ModuleList; their internals are outside this module's spec.
    """
    # TODO(synk): the EncoderBlock contents of the nn.ModuleList are external to this
    # module; any provided JAX-callable layers are applied here in plain JAX.
    for layer in layers:
        x = layer(x, mask)
    return layernorm_pallas(x, alpha, bias, eps)


# --------------------------------- demo -------------------------------------- #

if __name__ == "__main__":
    # Small shapes consistent with the module: batch=2, seq=8, d_model=32.
    B, S, D = 2, 8, 32
    eps = 1e-6

    key = jax.random.PRNGKey(0)
    x = jax.random.normal(key, (B, S, D), dtype=jnp.float32)
    mask = jnp.ones((B, 1, S, S), dtype=jnp.float32)   # unused with an empty layer list

    # Parameters as initialized in the PyTorch module: alpha=ones(1), bias=zeros(1).
    alpha = jnp.ones((1,), jnp.float32)
    bias = jnp.zeros((1,), jnp.float32)

    out = encoder_forward(x, mask, layers=(), alpha=alpha, bias=bias, eps=eps)
    out = jax.block_until_ready(out)

    # Plain-JAX reference (unbiased std, matching torch.Tensor.std()).
    mean = x.mean(axis=-1, keepdims=True)
    var = jnp.var(x, axis=-1, keepdims=True, ddof=1)
    ref = alpha * (x - mean) / jnp.sqrt(var + eps) + bias

    assert out.shape == (B, S, D)
    assert jnp.allclose(out, ref, atol=1e-5), "mismatch vs reference"

    print("KERNEL_OK")
</pallas_src>

<mosaic_0001>
module attributes {stable_mosaic.version = 11 : i64} {
  func.func @_layernorm_kernel(%arg0: i32, %arg1: memref<1x1xf32, #tpu.memory_space<smem>>, %arg2: memref<1x1xf32, #tpu.memory_space<smem>>, %arg3: memref<16x32xf32, #tpu.memory_space<vmem>>, %arg4: memref<16x32xf32, #tpu.memory_space<vmem>>) attributes {dimension_semantics = [#tpu.dimension_semantics<parallel>], iteration_bounds = array<i64: 1>, scalar_prefetch = 0 : i64, scratch_operands = 0 : i64, tpu.core_type = #tpu.core_type<tc>, window_params = [{transform_indices = @transform_0, window_bounds = array<i64: 1, 1>}, {transform_indices = @transform_1, window_bounds = array<i64: 1, 1>}, {transform_indices = @transform_2, window_bounds = array<i64: 16, 32>}, {transform_indices = @transform_3, window_bounds = array<i64: 16, 32>}]} {
    %c0 = arith.constant 0 : index
    %c0_0 = arith.constant 0 : index
    %0 = vector.load %arg3[%c0, %c0_0] : memref<16x32xf32, #tpu.memory_space<vmem>>, vector<16x32xf32>
    %cst = arith.constant dense<0.000000e+00> : vector<16xf32>
    %1 = vector.multi_reduction <add>, %0, %cst [1] : vector<16x32xf32> to vector<16xf32>
    %2 = vector.shape_cast %1 : vector<16xf32> to vector<16x1xf32>
    %cst_1 = arith.constant 3.200000e+01 : f32
    %3 = vector.broadcast %cst_1 : f32 to vector<16x1xf32>
    %4 = arith.divf %2, %3 : vector<16x1xf32>
    %5 = vector.broadcast %4 : vector<16x1xf32> to vector<16x32xf32>
    %6 = arith.subf %0, %5 : vector<16x32xf32>
    %7 = arith.mulf %6, %6 : vector<16x32xf32>
    %cst_2 = arith.constant dense<0.000000e+00> : vector<16xf32>
    %8 = vector.multi_reduction <add>, %7, %cst_2 [1] : vector<16x32xf32> to vector<16xf32>
    %9 = vector.shape_cast %8 : vector<16xf32> to vector<16x1xf32>
    %cst_3 = arith.constant 3.100000e+01 : f32
    %10 = vector.broadcast %cst_3 : f32 to vector<16x1xf32>
    %11 = arith.divf %9, %10 : vector<16x1xf32>
    %cst_4 = arith.constant 9.99999997E-7 : f32
    %12 = vector.broadcast %cst_4 : f32 to vector<16x1xf32>
    %13 = arith.addf %11, %12 : vector<16x1xf32>
    %14 = math.rsqrt %13 : vector<16x1xf32>
    %c0_5 = arith.constant 0 : index
    %c0_6 = arith.constant 0 : index
    %15 = memref.load %arg1[%c0_5, %c0_6] : memref<1x1xf32, #tpu.memory_space<smem>>
    %c0_7 = arith.constant 0 : index
    %c0_8 = arith.constant 0 : index
    %16 = memref.load %arg2[%c0_7, %c0_8] : memref<1x1xf32, #tpu.memory_space<smem>>
    %17 = vector.broadcast %15 : f32 to vector<16x32xf32>
    %18 = arith.mulf %17, %6 : vector<16x32xf32>
    %19 = vector.broadcast %14 : vector<16x1xf32> to vector<16x32xf32>
    %20 = arith.mulf %18, %19 : vector<16x32xf32>
    %21 = vector.broadcast %16 : f32 to vector<16x32xf32>
    %22 = arith.addf %20, %21 : vector<16x32xf32>
    %c0_9 = arith.constant 0 : index
    %c0_10 = arith.constant 0 : index
    %23 = vector.load %arg4[%c0_9, %c0_10] : memref<16x32xf32, #tpu.memory_space<vmem>>, vector<16x32xf32>
    tpu.vector_store %arg4[%c0_9, %c0_10], %22 {strides = array<i32>} : memref<16x32xf32, #tpu.memory_space<vmem>>, vector<16x32xf32>,
    return
  }
  func.func @transform_0(%arg0: i32) -> (i32, i32) {
    %c0_i32 = arith.constant 0 : i32
    %c0_i32_0 = arith.constant 0 : i32
    %c0_i32_1 = arith.constant 0 : i32
    return %c0_i32, %c0_i32_0 : i32, i32
  }
  func.func @transform_1(%arg0: i32) -> (i32, i32) {
    %c0_i32 = arith.constant 0 : i32
    %c0_i32_0 = arith.constant 0 : i32
    %c0_i32_1 = arith.constant 0 : i32
    return %c0_i32, %c0_i32_0 : i32, i32
  }
  func.func @transform_2(%arg0: i32) -> (i32, i32) {
    %c0_i32 = arith.constant 0 : i32
    %c0_i32_0 = arith.constant 0 : i32
    return %arg0, %c0_i32 : i32, i32
  }
  func.func @transform_3(%arg0: i32) -> (i32, i32) {
    %c0_i32 = arith.constant 0 : i32
    %c0_i32_0 = arith.constant 0 : i32
    return %arg0, %c0_i32 : i32, i32
  }
}

</mosaic_0001>

<llo_original>
// kernel: tpu_custom_call.1
$region0: #{tpu_custom_call.1}
  #allocation0 [shape = 'u32[]', space=smem, size = 0x4, offset = 0x4, fixed_abs, tag = 'smem constant byte address 0x4 - core index']
  #allocation1 [shape = 'u32[144,128]{1,0:T(1,128)}', space=vmem, size = 0x12000, scoped, tag = 'internal scratch']
  #allocation2 [shape = 'f32[1,1]{1,0:T(1,128)S(6)}', space=smem, size = 0x200, scoped, tag = 'scoped memory for tpu_custom_call.1']
  #allocation3 [shape = 'f32[1,1]{1,0:T(1,128)S(6)}', space=smem, size = 0x200, scoped, tag = 'scoped memory for tpu_custom_call.1']
  %s0 = inlined_call_operand.<no memory space> [shape: f32[1,1], index: 0, kind: input, shape index: {}]
  %s1 = inlined_call_operand.<no memory space> [shape: f32[1,1], index: 1, kind: input, shape index: {}]
  %s2 = inlined_call_operand.hbm [shape: f32[16,32], index: 2, kind: input, shape index: {}]
  %s3 = inlined_call_operand.hbm [shape: f32[16,32], index: 3, kind: output, shape index: {}]
  %s4 = sld [smem:[#allocation0]]
  $region26: #{tpu_custom_call.1} parent=0
    _
  %s6 = ssub.s32 1, %s4
  %s7 = scalar_select 0, %s6, %s4
  %8 = sst [smem:[#allocation2]] %s0
  %9 = sst [smem:[#allocation3]] %s1
  $region1: #{tpu_custom_call.1} parent=0
    #allocation4 [shape = 'u8[8192]{0}', space=vmem, size = 0x2000, scoped, tag = 'input window, operand 2, single buffered']
    #allocation5 [shape = 's32[1]{0}', space=sflag, size = 0x4, scoped, tag = 'scoped memory for tpu_custom_call.1']
    #allocation6 [shape = 's32[1]{0}', space=sflag, size = 0x4, scoped, tag = 'scoped memory for tpu_custom_call.1']
    #allocation7 [shape = 'u8[8192]{0}', space=vmem, size = 0x2000, scoped, tag = 'output window, operand 0, single buffered']
    %10 = vsyncpa [#allocation5], 0
    %11 = vsyncpa [#allocation6], 0
    // Predicated region
    $region2: #{tpu_custom_call.1} parent=1 // pred_check
      _
    $region3: #{tpu_custom_call.1} parent=1 // pred_check_branch
      %13 = sbr.rel (0) target = $region5
    $region4: #{tpu_custom_call.1} parent=1 // pred_region
      _
    $region5: #{tpu_custom_call.1} parent=1 // pred_fallthru
      _
    // Predicated region
    $region6: #{tpu_custom_call.1} parent=1 // pred_check
      _
    $region7: #{tpu_custom_call.1} parent=1 // pred_check_branch
      %15 = sbr.rel (0) target = $region9
    $region8: #{tpu_custom_call.1} parent=1 // pred_region
      _
    $region9: #{tpu_custom_call.1} parent=1 // pred_fallthru
      _
    // Predicated region
    $region10: #{tpu_custom_call.1} parent=1 // pred_check
      _
    $region11: #{tpu_custom_call.1} parent=1 // pred_check_branch
      %17 = sbr.rel (0) target = $region13
    $region12: #{tpu_custom_call.1} parent=1 // pred_region
      %s19 = ssub.s32 256, 256
      %20 = vsyncadd [#allocation5], %s19
      %s21 = sshll.u32 [#allocation4], 4
      %s22 = int_to_ptr.vmem [resolvable:$true] %s21
      %27 = dma.hbm_to_vmem [thread:$0]  %s2, 256, %s22, [#allocation5], 128, 128, 8
    $region13: #{tpu_custom_call.1} parent=1 // pred_fallthru
      _
    // Predicated region
    $region14: #{tpu_custom_call.1} parent=1 // pred_check
      _
    $region15: #{tpu_custom_call.1} parent=1 // pred_check_branch
      %29 = sbr.rel (0) target = $region17
    $region16: #{tpu_custom_call.1} parent=1 // pred_region
      %30 = dma.done [#allocation5], 256
    $region17: #{tpu_custom_call.1} parent=1 // pred_fallthru
      _
    %v31 = vld [vmem:[#allocation4] sm:$0xff]
    %v32 = vld [vmem:[#allocation4 + $0x8] sm:$0xff]
    %vm33 = vcmask 261120
    %v34 = vsel %vm33, %v31, 0.0
    %35 = vadd.xlane.f32.xlu0 %v34
    %v36 = vpop.xlane.xlu0 %35
    %v37 = vsel %vm33, %v32, 0.0
    %38 = vadd.xlane.f32.xlu0 %v37
    %v39 = vpop.xlane.xlu0 %38
    %v40 = vrcp.pop 32.0
    %v41 = vmul.f32 %v36, %v40
    %v42 = vmul.f32 %v39, %v40
    %v43 = vsub.f32 %v31, %v41
    %v44 = vsub.f32 %v32, %v42
    %v45 = vmul.f32 %v43, %v43
    %v46 = vmul.f32 %v44, %v44
    %v47 = vsel %vm33, %v45, 0.0
    %48 = vadd.xlane.f32.xlu0 %v47
    %v49 = vpop.xlane.xlu0 %48
    %v50 = vsel %vm33, %v46, 0.0
    %51 = vadd.xlane.f32.xlu0 %v50
    %v52 = vpop.xlane.xlu0 %51
    %v53 = vrcp.pop 31.0
    %v54 = vmul.f32 %v49, %v53
    %v55 = vmul.f32 %v52, %v53
    %v56 = vadd.f32 %v54, 1e-06
    %v57 = vadd.f32 %v55, 1e-06
    %v58 = vrsqrt.pop %v56
    %v59 = vrsqrt.pop %v57
    %s60 = sld [smem:[#allocation2]]
    %s61 = sld [smem:[#allocation3]]
    %v62 = vstv %s60
    %v63 = vmul.f32 %v62, %v43
    %v64 = vmul.f32 %v62, %v44
    %v65 = vmul.f32 %v63, %v58
    %v66 = vmul.f32 %v64, %v59
    %v67 = vstv %s61
    %v68 = vadd.f32 %v65, %v67
    %v69 = vadd.f32 %v66, %v67
    %70 = vst.msk [vmem:[#allocation7] sm:$0xff] %vm33, %v68
    %71 = vst.msk [vmem:[#allocation7 + $0x8] sm:$0xff] %vm33, %v69
    // Predicated region
    $region18: #{tpu_custom_call.1} parent=1 // pred_check
      _
    $region19: #{tpu_custom_call.1} parent=1 // pred_check_branch
      %73 = sbr.rel (0) target = $region21
    $region20: #{tpu_custom_call.1} parent=1 // pred_region
      %s75 = ssub.s32 256, 256
      %76 = vsyncadd [#allocation6], %s75
      %s77 = sshll.u32 [#allocation7], 4
      %s78 = int_to_ptr.vmem [resolvable:$true] %s77
      %83 = dma.vmem_to_hbm [thread:$0]  %s78, 256, %s3, [#allocation6], 128, 128, 8
    $region21: #{tpu_custom_call.1} parent=1 // pred_fallthru
      _
    // Predicated region
    $region22: #{tpu_custom_call.1} parent=1 // pred_check
      _
    $region23: #{tpu_custom_call.1} parent=1 // pred_check_branch
      %85 = sbr.rel (0) target = $region25
    $region24: #{tpu_custom_call.1} parent=1 // pred_region
      %86 = dma.done [#allocation6], 256
    $region25: #{tpu_custom_call.1} parent=1 // pred_fallthru
      _
    %87 = vsyncpa [#allocation5], 1
    %88 = vsyncpa [#allocation6], 1

</llo_original>
